<compile_context>
chip_gen: v5e
topology: v5e:2x2
jax: 0.10.0
libtpu: 0.0.40
codegen_flags: <defaults>
</compile_context>

<pallas_src>
import jax
import jax.numpy as jnp
from jax.experimental import pallas as pl
from jax.experimental.pallas import tpu as pltpu


def _round_up(n, m):
    return ((n + m - 1) // m) * m


def noef_kernel(x_ref, w1_ref, b1_ref, wo_ref, c_ref, out_ref):
    # x: (TM, F) f32/bf16   w1: (F, H2p) bf16   b1/wo: (1, H2p) f32   c: SMEM (1,)
    xb = x_ref[...].astype(jnp.bfloat16)              # cheap VPU cast -> bf16 MXU pass
    h = jnp.tanh(
        jnp.dot(xb, w1_ref[...], preferred_element_type=jnp.float32) + b1_ref[...]
    )                                                 # (TM, H2p) f32
    # (1, H2p) contracted with (TM, H2p) on the hidden axis -> lane-dense (1, TM)
    logit = jax.lax.dot_general(
        wo_ref[...], h,
        dimension_numbers=(((1,), (1,)), ((), ())),
        preferred_element_type=jnp.float32,
    )                                                 # (1, TM)
    out_ref[...] = jax.nn.sigmoid(logit + c_ref[0])


def _fuse_params(params, lane=128):
    (w1a, b1a, w2a, b2a, w1b, b1b, w2b, b2b, wc1, bc1, wc2, bc2) = params
    # Fold the linear classifier:
    #   (tot @ Wc1 + bc1) @ Wc2 + bc2 == tot @ (Wc1 @ Wc2) + (bc1 @ Wc2 + bc2)
    alpha = wc1 @ wc2                                   # (2, 1)
    c0 = (bc1 @ wc2 + bc2)[0, 0]                        # scalar
    # Fuse the two energy MLPs: one shared (F, 2H) first layer ...
    w1f = jnp.concatenate([w1a, w1b], axis=1)           # (F, 2H)
    b1f = jnp.concatenate([b1a, b1b], axis=1)           # (1, 2H)
    # ... and fold both second layers + alpha into one (1, 2H) output row.
    wo_row = jnp.concatenate(
        [w2a * alpha[0, 0], w2b * alpha[1, 0]], axis=0
    ).T                                                 # (1, 2H)
    c_total = b2a[0, 0] * alpha[0, 0] + b2b[0, 0] * alpha[1, 0] + c0

    # Zero-pad fused hidden width up to a lane multiple (exact no-op numerically).
    H2 = w1f.shape[1]
    H2p = _round_up(H2, lane)
    if H2p != H2:
        pad = H2p - H2
        w1f = jnp.pad(w1f, ((0, 0), (0, pad)))
        b1f = jnp.pad(b1f, ((0, 0), (0, pad)))
        wo_row = jnp.pad(wo_row, ((0, 0), (0, pad)))

    w1f = w1f.astype(jnp.bfloat16)                      # large resident weight -> bf16
    b1f = b1f.astype(jnp.float32)                       # tiny; keep f32 (f32 accum path)
    wo_row = wo_row.astype(jnp.float32)                 # tiny; keep f32
    c_arr = jnp.asarray([c_total], dtype=jnp.float32)   # (1,) scalar bias (SMEM)
    return w1f, b1f, wo_row, c_arr


def _pick_tm(B, F, x_itemsize, tm_cap=1024, x_vmem_budget=20 << 20):
    """Batch tile: multiple of 128 when gridded, even grid >= 2 when possible,
    double-buffered x stream kept inside a conservative VMEM budget."""
    if B <= 128:
        return _round_up(B, 8)            # single (possibly ragged) block
    tm_cap = max(128, (tm_cap // 128) * 128)
    steps = max(2, pl.cdiv(B, tm_cap))    # >= 2 steps so v7x's 2 TCs both get work
    if steps % 2:
        steps += 1                        # even split -> balanced across cores
    tm = min(tm_cap, _round_up(pl.cdiv(B, steps), 128))
    while tm > 128 and 2 * tm * F * x_itemsize > x_vmem_budget:
        tm -= 128                         # stay inside scoped VMEM (v5e 16 MiB default)
    return tm


def noef_forward(x, params, *, tm=1024):
    B, F = x.shape
    w1f, b1f, wo_row, c_arr = _fuse_params(params)
    H2p = w1f.shape[1]

    TM = _pick_tm(B, F, x.dtype.itemsize, tm_cap=tm)
    grid = pl.cdiv(B, TM)                 # ragged last block: no wrapper-side pad of x
    Bout = grid * TM                      # padded output slab (tiny; unmasked stores)

    cost = pl.CostEstimate(
        flops=2 * B * F * H2p + 2 * B * H2p,
        transcendentals=B * (H2p + 1),
        bytes_accessed=(B * F * x.dtype.itemsize
                        + int(w1f.size) * 2
                        + (int(b1f.size) + int(wo_row.size) + Bout) * 4),
    )

    out = pl.pallas_call(
        noef_kernel,
        out_shape=jax.ShapeDtypeStruct((1, Bout), jnp.float32),
        grid=(grid,),
        in_specs=[
            pl.BlockSpec((TM, F), lambda i: (i, 0)),            # x streamed per tile
            pl.BlockSpec((F, H2p), lambda i: (0, 0)),           # fused W1 (bf16, resident)
            pl.BlockSpec((1, H2p), lambda i: (0, 0)),           # fused b1 (resident)
            pl.BlockSpec((1, H2p), lambda i: (0, 0)),           # fused output row
            pl.BlockSpec(memory_space=pltpu.MemorySpace.SMEM),  # scalar bias
        ],
        out_specs=pl.BlockSpec((1, TM), lambda i: (0, i)),      # lane-dense output block
        compiler_params=pltpu.CompilerParams(
            dimension_semantics=("parallel",),                  # shard batch over TCs (v7x)
            vmem_limit_bytes=32 << 20,                          # >= default on all gens
        ),
        cost_estimate=cost,
    )(x, w1f, b1f, wo_row, c_arr)
    return out[0, :B].reshape(B, 1)


def make_params(key, feat, hidden):
    ks = jax.random.split(key, 12)

    def lin(kw, kb, fan_in, fan_out):
        # PyTorch nn.Linear-style uniform init, weight stored (in, out)
        bound = 1.0 / jnp.sqrt(fan_in)
        w = jax.random.uniform(kw, (fan_in, fan_out), jnp.float32, -bound, bound)
        b = jax.random.uniform(kb, (1, fan_out), jnp.float32, -bound, bound)
        return w, b

    # energy model 1: MLP feat -> hidden -> 1 (synthetic stand-in for model1)
    w1a, b1a = lin(ks[0], ks[1], feat, hidden)
    w2a, b2a = lin(ks[2], ks[3], hidden, 1)
    # energy model 2: MLP feat -> hidden -> 1 (synthetic stand-in for model2)
    w1b, b1b = lin(ks[4], ks[5], feat, hidden)
    w2b, b2b = lin(ks[6], ks[7], hidden, 1)
    # classifier: Linear(2, 100), Linear(100, 1), Sigmoid
    wc1, bc1 = lin(ks[8], ks[9], 2, 100)
    wc2, bc2 = lin(ks[10], ks[11], 100, 1)
    return (w1a, b1a, w2a, b2a, w1b, b1b, w2b, b2b, wc1, bc1, wc2, bc2)


def noef_reference(x, params):
    # Mirrors the PyTorch module exactly (no folding), f32 throughout.
    (w1a, b1a, w2a, b2a, w1b, b1b, w2b, b2b, wc1, bc1, wc2, bc2) = params
    e1 = jnp.tanh(x @ w1a + b1a) @ w2a + b2a
    e2 = jnp.tanh(x @ w1b + b1b) @ w2b + b2b
    tot = jnp.concatenate([e1, e2], axis=1)
    return jax.nn.sigmoid((tot @ wc1 + bc1) @ wc2 + bc2)


if __name__ == "__main__":
    B, F, H = 8, 32, 32
    key = jax.random.PRNGKey(0)
    kx, kp = jax.random.split(key)
    params = make_params(kp, F, H)

    # 1) small single-tile path, f32 x (bf16 weights -> loosened tolerance)
    x = jax.random.normal(kx, (B, F), jnp.float32)
    out = jax.block_until_ready(noef_forward(x, params))
    ref = noef_reference(x, params)
    assert out.shape == (B, 1)
    assert jnp.allclose(out, ref, atol=1e-2, rtol=1e-2), (out, ref)

    # 2) multi-tile path with bf16-streamed x and a ragged last block (B=600, TM=384)
    x2 = jax.random.normal(kx, (600, F), jnp.float32)
    x2_bf16 = x2.astype(jnp.bfloat16)
    out2 = jax.block_until_ready(noef_forward(x2_bf16, params))
    ref2 = noef_reference(x2_bf16.astype(jnp.float32), params)
    assert out2.shape == (600, 1)
    assert jnp.allclose(out2, ref2, atol=1e-2, rtol=1e-2)

    # 3) grid=2 with a mostly-out-of-bounds ragged tail (B=130, TM=128)
    x3 = jax.random.normal(kx, (130, F), jnp.float32)
    out3 = jax.block_until_ready(noef_forward(x3, params))
    ref3 = noef_reference(x3, params)
    assert out3.shape == (130, 1)
    assert jnp.allclose(out3, ref3, atol=1e-2, rtol=1e-2)

    print("KERNEL_OK")
</pallas_src>

<mosaic_0001>
module attributes {stable_mosaic.version = 11 : i64} {
  func.func @noef_kernel(%arg0: i32, %arg1: memref<8x32xf32, #tpu.memory_space<vmem>>, %arg2: memref<32x128xbf16, #tpu.memory_space<vmem>>, %arg3: memref<1x128xf32, #tpu.memory_space<vmem>>, %arg4: memref<1x128xf32, #tpu.memory_space<vmem>>, %arg5: memref<1xf32, #tpu.memory_space<smem>>, %arg6: memref<1x8xf32, #tpu.memory_space<vmem>>) attributes {dimension_semantics = [#tpu.dimension_semantics<parallel>], iteration_bounds = array<i64: 1>, scalar_prefetch = 0 : i64, scratch_operands = 0 : i64, tpu.core_type = #tpu.core_type<tc>, window_params = [{transform_indices = @transform_0, window_bounds = array<i64: 8, 32>}, {pipeline_mode = #tpu.pipeline_mode<synchronous>, transform_indices = @transform_1, window_bounds = array<i64: 32, 128>}, {pipeline_mode = #tpu.pipeline_mode<synchronous>, transform_indices = @transform_2, window_bounds = array<i64: 1, 128>}, {pipeline_mode = #tpu.pipeline_mode<synchronous>, transform_indices = @transform_3, window_bounds = array<i64: 1, 128>}, {transform_indices = @transform_4, window_bounds = array<i64: 1>}, {transform_indices = @transform_5, window_bounds = array<i64: 1, 8>}]} {
    %c0 = arith.constant 0 : index
    %c0_0 = arith.constant 0 : index
    %0 = vector.load %arg1[%c0, %c0_0] : memref<8x32xf32, #tpu.memory_space<vmem>>, vector<8x32xf32>
    %1 = arith.truncf %0 : vector<8x32xf32> to vector<8x32xbf16>
    %c0_1 = arith.constant 0 : index
    %c0_2 = arith.constant 0 : index
    %2 = vector.load %arg2[%c0_1, %c0_2] : memref<32x128xbf16, #tpu.memory_space<vmem>>, vector<32x128xbf16>
    %cst = arith.constant dense<0.000000e+00> : vector<8x128xf32>
    %3 = tpu.matmul %1, %2, %cst {dimension_numbers = #tpu.dot_dimension_numbers<[1], [0], [0], [1], [0, 0, 1, 1], [], []>} : vector<8x32xbf16>, vector<32x128xbf16>, vector<8x128xf32> -> vector<8x128xf32>
    %c0_3 = arith.constant 0 : index
    %c0_4 = arith.constant 0 : index
    %4 = vector.load %arg3[%c0_3, %c0_4] : memref<1x128xf32, #tpu.memory_space<vmem>>, vector<1x128xf32>
    %5 = vector.broadcast %4 : vector<1x128xf32> to vector<8x128xf32>
    %6 = arith.addf %3, %5 : vector<8x128xf32>
    %7 = math.tanh %6 : vector<8x128xf32>
    %c0_5 = arith.constant 0 : index
    %c0_6 = arith.constant 0 : index
    %8 = vector.load %arg4[%c0_5, %c0_6] : memref<1x128xf32, #tpu.memory_space<vmem>>, vector<1x128xf32>
    %cst_7 = arith.constant dense<0.000000e+00> : vector<1x8xf32>
    %9 = tpu.matmul %8, %7, %cst_7 {dimension_numbers = #tpu.dot_dimension_numbers<[1], [1], [0], [0], [0, 0, 1, 0], [], []>} : vector<1x128xf32>, vector<8x128xf32>, vector<1x8xf32> -> vector<1x8xf32>
    %c0_8 = arith.constant 0 : index
    %10 = memref.load %arg5[%c0_8] : memref<1xf32, #tpu.memory_space<smem>>
    %11 = vector.broadcast %10 : f32 to vector<1x8xf32>
    %12 = arith.addf %9, %11 : vector<1x8xf32>
    %13 = arith.negf %12 : vector<1x8xf32>
    %14 = math.exp %13 : vector<1x8xf32>
    %cst_9 = arith.constant 1.000000e+00 : f32
    %15 = vector.broadcast %cst_9 : f32 to vector<1x8xf32>
    %16 = arith.addf %15, %14 : vector<1x8xf32>
    %17 = arith.divf %15, %16 : vector<1x8xf32>
    %c0_10 = arith.constant 0 : index
    %c0_11 = arith.constant 0 : index
    %18 = vector.load %arg6[%c0_10, %c0_11] : memref<1x8xf32, #tpu.memory_space<vmem>>, vector<1x8xf32>
    tpu.vector_store %arg6[%c0_10, %c0_11], %17 {strides = array<i32>} : memref<1x8xf32, #tpu.memory_space<vmem>>, vector<1x8xf32>,
    return
  }
  func.func @transform_0(%arg0: i32) -> (i32, i32) {
    %c0_i32 = arith.constant 0 : i32
    %c0_i32_0 = arith.constant 0 : i32
    return %arg0, %c0_i32 : i32, i32
  }
  func.func @transform_1(%arg0: i32) -> (i32, i32) {
    %c0_i32 = arith.constant 0 : i32
    %c0_i32_0 = arith.constant 0 : i32
    %c0_i32_1 = arith.constant 0 : i32
    return %c0_i32, %c0_i32_0 : i32, i32
  }
  func.func @transform_2(%arg0: i32) -> (i32, i32) {
    %c0_i32 = arith.constant 0 : i32
    %c0_i32_0 = arith.constant 0 : i32
    %c0_i32_1 = arith.constant 0 : i32
    return %c0_i32, %c0_i32_0 : i32, i32
  }
  func.func @transform_3(%arg0: i32) -> (i32, i32) {
    %c0_i32 = arith.constant 0 : i32
    %c0_i32_0 = arith.constant 0 : i32
    %c0_i32_1 = arith.constant 0 : i32
    return %c0_i32, %c0_i32_0 : i32, i32
  }
  func.func @transform_4(%arg0: i32) -> i32 {
    %c0_i32 = arith.constant 0 : i32
    %c0_i32_0 = arith.constant 0 : i32
    return %c0_i32 : i32
  }
  func.func @transform_5(%arg0: i32) -> (i32, i32) {
    %c0_i32 = arith.constant 0 : i32
    %c0_i32_0 = arith.constant 0 : i32
    return %c0_i32, %arg0 : i32, i32
  }
}

</mosaic_0001>

<llo_original>
// kernel: tpu_custom_call.1
$region0: #{tpu_custom_call.1}
  #allocation0 [shape = 'u32[]', space=smem, size = 0x4, offset = 0x4, fixed_abs, tag = 'smem constant byte address 0x4 - core index']
  #allocation1 [shape = 'u32[72,128]{1,0:T(1,128)}', space=vmem, size = 0x9000, scoped, tag = 'internal scratch']
  #allocation2 [shape = 'f32[1]{0:T(128)S(6)}', space=smem, size = 0x200, scoped, tag = 'scoped memory for tpu_custom_call.1']
  %s0 = inlined_call_operand.hbm [shape: f32[8,32], index: 0, kind: input, shape index: {}]
  %s1 = inlined_call_operand.hbm [shape: bf16[32,128], index: 1, kind: input, shape index: {}]
  %s2 = inlined_call_operand.vmem [shape: f32[1,128], index: 2, kind: input, shape index: {}]
  %s3 = inlined_call_operand.vmem [shape: f32[1,128], index: 3, kind: input, shape index: {}]
  %s4 = inlined_call_operand.<no memory space> [shape: f32[1], index: 4, kind: input, shape index: {}]
  %s5 = inlined_call_operand.hbm [shape: f32[1,8], index: 5, kind: output, shape index: {}]
  %s6 = sld [smem:[#allocation0]]
  $region38: #{tpu_custom_call.1} parent=0
    _
  %s8 = ssub.s32 1, %s6
  %s9 = scalar_select 0, %s8, %s6
  %10 = sst [smem:[#allocation2]] %s4
  $region1: #{tpu_custom_call.1} parent=0
    #allocation3 [shape = 'u8[4096]{0}', space=vmem, size = 0x1000, scoped, tag = 'input window, operand 0, single buffered']
    #allocation4 [shape = 's32[1]{0}', space=sflag, size = 0x4, scoped, tag = 'scoped memory for tpu_custom_call.1']
    #allocation5 [shape = 's32[1]{0}', space=sflag, size = 0x4, scoped, tag = 'scoped memory for tpu_custom_call.1']
    #allocation6 [shape = 'u8[8192]{0}', space=vmem, size = 0x2000, scoped, tag = 'input window, operand 1, single buffered']
    #allocation7 [shape = 's32[1]{0}', space=sflag, size = 0x4, scoped, tag = 'scoped memory for tpu_custom_call.1']
    #allocation8 [shape = 'u8[512]{0}', space=vmem, size = 0x400, scoped, tag = 'output window, operand 0, single buffered']
    %11 = vsyncpa [#allocation4], 0
    %12 = vsyncpa [#allocation7], 0
    %13 = vsyncpa [#allocation5], 0
    // Predicated region
    $region2: #{tpu_custom_call.1} parent=1 // pred_check
      _
    $region3: #{tpu_custom_call.1} parent=1 // pred_check_branch
      %15 = sbr.rel (0) target = $region5
    $region4: #{tpu_custom_call.1} parent=1 // pred_region
      %17 = vsyncadd [#allocation4], 0
      %s19 = sshll.u32 %s0, 4
      %s20 = int_to_ptr.hbm [resolvable:$true] %s19
      %s21 = sshll.u32 [#allocation3], 4
      %s22 = int_to_ptr.vmem [resolvable:$true] %s21
      %24 = dma.hbm_to_vmem [thread:$0]  %s20, 128, %s22, [#allocation4]
    $region5: #{tpu_custom_call.1} parent=1 // pred_fallthru
      _
    // Predicated region
    $region6: #{tpu_custom_call.1} parent=1 // pred_check
      _
    $region7: #{tpu_custom_call.1} parent=1 // pred_check_branch
      %26 = sbr.rel (0) target = $region9
    $region8: #{tpu_custom_call.1} parent=1 // pred_region
      %28 = vsyncadd [#allocation7], 0
      %s29 = sshll.u32 %s1, 4
      %s30 = int_to_ptr.hbm [resolvable:$true] %s29
      %s31 = sshll.u32 [#allocation6], 4
      %s32 = int_to_ptr.vmem [resolvable:$true] %s31
      %37 = dma.hbm_to_vmem [thread:$0]  %s30, 256, %s32, [#allocation7], 64, 64, 4
    $region9: #{tpu_custom_call.1} parent=1 // pred_fallthru
      _
    // Predicated region
    $region10: #{tpu_custom_call.1} parent=1 // pred_check
      _
    $region11: #{tpu_custom_call.1} parent=1 // pred_check_branch
      %39 = sbr.rel (0) target = $region13
    $region12: #{tpu_custom_call.1} parent=1 // pred_region
      _
    $region13: #{tpu_custom_call.1} parent=1 // pred_fallthru
      _
    // Predicated region
    $region14: #{tpu_custom_call.1} parent=1 // pred_check
      _
    $region15: #{tpu_custom_call.1} parent=1 // pred_check_branch
      %41 = sbr.rel (0) target = $region17
    $region16: #{tpu_custom_call.1} parent=1 // pred_region
      _
    $region17: #{tpu_custom_call.1} parent=1 // pred_fallthru
      _
    // Predicated region
    $region18: #{tpu_custom_call.1} parent=1 // pred_check
      _
    $region19: #{tpu_custom_call.1} parent=1 // pred_check_branch
      %43 = sbr.rel (0) target = $region21
    $region20: #{tpu_custom_call.1} parent=1 // pred_region
      _
    $region21: #{tpu_custom_call.1} parent=1 // pred_fallthru
      _
    // Predicated region
    $region22: #{tpu_custom_call.1} parent=1 // pred_check
      _
    $region23: #{tpu_custom_call.1} parent=1 // pred_check_branch
      %45 = sbr.rel (0) target = $region25
    $region24: #{tpu_custom_call.1} parent=1 // pred_region
      %47 = dma.done [#allocation4], 128
    $region25: #{tpu_custom_call.1} parent=1 // pred_fallthru
      _
    // Predicated region
    $region26: #{tpu_custom_call.1} parent=1 // pred_check
      _
    $region27: #{tpu_custom_call.1} parent=1 // pred_check_branch
      %49 = sbr.rel (0) target = $region29
    $region28: #{tpu_custom_call.1} parent=1 // pred_region
      %51 = dma.done [#allocation7], 256
    $region29: #{tpu_custom_call.1} parent=1 // pred_fallthru
      _
    %v53 = vld [vmem:[#allocation3] sm:$0xff]
    %v54 = vpack.c.bf16 %v53, %v53
    %v55 = vld [vmem:[#allocation6] sm:$0xf]
    %v56 = vld [vmem:[#allocation6 + $0x4] sm:$0xf]
    %v57 = vld [vmem:[#allocation6 + $0x8] sm:$0xf]
    %v58 = vld [vmem:[#allocation6 + $0xc] sm:$0xf]
    %v59 = vld [vmem:[%s2] sm:$0x1]
    %v61 = vperm.slane %v59, 0
    %v67 = vunpack.c.l.b16 %v55
    %v68 = vunpack.c.l.b16 %v56
    %v69 = vunpack.c.l.b16 %v57
    %v70 = vunpack.c.l.b16 %v58
    %v71 = vpack.c.b16 %v68, %v67
    %v72 = vpack.c.b16 %v70, %v69
    %vm75 = vcmask 261120
    %v77 = vsel %vm75, %v54, 0
    %79 = vmatpush.bf16.msra.mxu0 0
    %80 = vmatpush.bf16.msra.mxu0 0
    %81 = vmatpush.bf16.msra.mxu0 0
    %82 = vmatpush.bf16.msra.mxu0 0
    %83 = vmatpush.bf16.msra.mxu0 0
    %84 = vmatpush.bf16.msra.mxu0 0
    %85 = vmatpush.bf16.msra.mxu0 %v72
    %86 = vmatpush.bf16.msra.mxu0 %v71
    %87 = vmatmul.bf16.gmra.mxu0 %v77
    %v88 = vpop.f32.mrf.mxu0
    %v89 = vadd.f32 %v61, %v88
    %v90 = vpop.f32.mrf.mxu0
    %91 = vdwg.mxu0
    %v92 = vtanh.pop %v89
    %v93 = vld [vmem:[%s3] sm:$0x1]
    %s94 = sld [smem:[#allocation2]]
    %v95 = vstv %s94
    %96 = vmatpush.xpose.msra.mxu0 0.0
    %97 = vmatpush.xpose.msra.mxu0 0.0
    %98 = vmatpush.xpose.msra.mxu0 0.0
    %99 = vmatpush.xpose.msra.mxu0 0.0
    %100 = vmatpush.xpose.msra.mxu0 0.0
    %101 = vmatpush.xpose.msra.mxu0 0.0
    %102 = vmatpush.xpose.msra.mxu0 0.0
    %103 = vmatpush.xpose.msra.mxu0 0.0
    %104 = vmatpush.xpose.msra.mxu0 0.0
    %105 = vmatpush.xpose.msra.mxu0 0.0
    %106 = vmatpush.xpose.msra.mxu0 0.0
    %107 = vmatpush.xpose.msra.mxu0 0.0
    %108 = vmatpush.xpose.msra.mxu0 0.0
    %109 = vmatpush.xpose.msra.mxu0 0.0
    %110 = vmatpush.xpose.msra.mxu0 0.0
    %111 = vmatpush.xpose.msra.mxu0 %v92
    %112 = vmatmul.f32.gmra.mxu0 %v93
    %v113 = vpop.f32.mrf.mxu0
    %v114 = vadd.f32 %v95, %v113
    %115 = vdwg.mxu0
    %v116 = vxor.u32 %v114, 2147483648
    %v117 = vmul.f32 %v116, 1.442695
    %v118 = vpow.pop %v117
    %v119 = vadd.f32 %v118, 1.0
    %v120 = vrcp.pop %v119
    %v121 = vmul.f32 %v119, %v120
    %v122 = vsub.f32 1.0, %v121
    %v123 = vmul.f32 %v120, %v122
    %v124 = vadd.f32 %v120, %v123
    %vm125 = vweird.f32 %v119
    %vm126 = vweird.f32 %v120
    %vm127 = vmor %vm125, %vm126
    %v128 = vsel %vm127, %v120, %v124
    %v129 = vand.u32 2147483647, %v119
    %vm130 = vcmp.eq.f32.partialorder %v129, 8.507059e+37
    %v131 = vand.u32 %v119, 2147483648
    %v132 = vor.u32 1.1754944e-38, %v131
    %v133 = vsel %vm130, %v132, %v128
    %v134 = vmul.f32 1.0, %v133
    %vm135 = vcmask 57344
    %136 = vst.msk [vmem:[#allocation8] sm:$0x1] %vm135, %v134
    // Predicated region
    $region30: #{tpu_custom_call.1} parent=1 // pred_check
      _
    $region31: #{tpu_custom_call.1} parent=1 // pred_check_branch
      %138 = sbr.rel (0) target = $region33
    $region32: #{tpu_custom_call.1} parent=1 // pred_region
      %140 = vsyncadd [#allocation5], 0
      %s142 = sshll.u32 [#allocation8], 4
      %s143 = int_to_ptr.vmem [resolvable:$true] %s142
      %s144 = sshll.u32 %s5, 4
      %s145 = int_to_ptr.hbm [resolvable:$true] %s144
      %147 = dma.vmem_to_hbm [thread:$0]  %s143, 16, %s145, [#allocation5]
    $region33: #{tpu_custom_call.1} parent=1 // pred_fallthru
      _
    // Predicated region
    $region34: #{tpu_custom_call.1} parent=1 // pred_check
      _
    $region35: #{tpu_custom_call.1} parent=1 // pred_check_branch
      %149 = sbr.rel (0) target = $region37
    $region36: #{tpu_custom_call.1} parent=1 // pred_region
      %151 = dma.done [#allocation5], 16
    $region37: #{tpu_custom_call.1} parent=1 // pred_fallthru
      _
    %152 = vsyncpa [#allocation4], 1
    %153 = vsyncpa [#allocation7], 1
    %154 = vsyncpa [#allocation5], 1

</llo_original>
